<compile_context>
chip_gen: v7x
topology: tpu7x:2x2x1
jax: 0.10.0
libtpu: 0.0.40
codegen_flags: <defaults>
</compile_context>

<pallas_src>
import functools

import jax
import jax.numpy as jnp
import numpy as np
from jax.experimental import pallas as pl
from jax.experimental.pallas import tpu as pltpu


def _lif_kernel(xf_ref, v_ref, trace_ref, refrac_ref,
                spikes_ref, trace_out_ref, v_out_ref, refrac_out_ref,
                *, thresh, v_rest, alpha_v, alpha_t, tau_v, tau_t, dt,
                duration_refrac):
    """Elementwise LIF state update on one (TR, 128) lane-dense row tile."""
    i_in = xf_ref[...]                      # folded presynaptic input, f32
    v = v_ref[...]
    trace = trace_ref[...]
    refrac = refrac_ref[...]

    # ---- lif_linear_voltage_update (gated by refractory state) ----
    # `<= 0` instead of `== 0`: robust to float drift in the countdown.
    non_refrac = (refrac <= 0.0).astype(v.dtype)
    v = v + non_refrac * (alpha_v * i_in - (dt * tau_v) * (v - v_rest))

    # ---- spiking ----
    spikes_b = v >= thresh
    spikes_f = spikes_b.astype(v.dtype)

    # ---- linear_trace_update ----
    trace = trace - (dt * tau_t) * trace + alpha_t * spikes_f

    # ---- refractory countdown (clamped at 0) + reset-to-rest ----
    if duration_refrac > 0:
        refrac = jnp.maximum(refrac - dt, 0.0)
        refrac = refrac + duration_refrac * spikes_f
    # Scalar v_rest: avoids materializing a full-tile broadcast.
    v = jnp.where(spikes_b, v_rest, v)

    spikes_ref[...] = spikes_b.astype(spikes_ref.dtype)   # int8 spike slab
    trace_out_ref[...] = trace
    v_out_ref[...] = v
    refrac_out_ref[...] = refrac


def _pick_row_tile(R):
    """Largest row tile ~512 (multiple of 32 for the int8 spike output)."""
    if R <= 512:
        return R                     # full-dim block: always layout-legal
    for tr in (512, 256, 128, 64, 32):
        if R % tr == 0:
            return tr
    # TODO(synk): ragged R — fall back to a single big block.
    return R


def _lif_step(x, v, trace, refrac, *, cells_shape, R, L, TR,
              thresh, v_rest, alpha_v, alpha_t, tau_v, tau_t, dt,
              duration_refrac):
    # fold: sum presynaptic spike train over the last axis in *native* layout
    # (no transpose of the big tensor; upcast fuses into the reduce; x can
    # stay bool/int8 in HBM).
    x_fold = jnp.sum(x, axis=-1, dtype=jnp.float32).reshape(R, L)

    kernel = functools.partial(
        _lif_kernel, thresh=thresh, v_rest=v_rest, alpha_v=alpha_v,
        alpha_t=alpha_t, tau_v=tau_v, tau_t=tau_t, dt=dt,
        duration_refrac=duration_refrac)

    cell_spec = pl.BlockSpec((TR, L), lambda i: (i, 0))
    f32_out = jax.ShapeDtypeStruct((R, L), jnp.float32)

    spikes_i8, trace_n, v_n, refrac_n = pl.pallas_call(
        kernel,
        out_shape=(jax.ShapeDtypeStruct((R, L), jnp.int8),
                   f32_out, f32_out, f32_out),
        grid=(R // TR,),
        in_specs=[cell_spec, cell_spec, cell_spec, cell_spec],
        out_specs=(cell_spec, cell_spec, cell_spec, cell_spec),
        # In-place state update: v -> v_out, trace -> trace_out, refrac -> refrac_out.
        input_output_aliases={1: 2, 2: 1, 3: 3},
        compiler_params=pltpu.CompilerParams(
            dimension_semantics=("parallel",)),
    )(x_fold, v, trace, refrac)

    spikes = spikes_i8.astype(jnp.bool_).reshape(cells_shape)
    trace_out = trace_n.reshape(cells_shape)
    return spikes, trace_out, v_n, trace_n, refrac_n


class LIFNeuronPallas:
    """JAX/Pallas port of LIFNeuron (linear updates, store_trace=False)."""

    def __init__(self, cells_shape, thresh, v_rest, alpha_v, alpha_t, dt,
                 duration_refrac, tau_v, tau_t):
        assert duration_refrac % dt == 0, \
            'dt does not fit an integer amount of times in duration_refrac.'
        assert duration_refrac >= 0, 'duration_refrac should be non-negative.'
        assert 0.0 <= tau_v <= 1.0 and 0.0 <= tau_t <= 1.0, \
            'Decays for linear updates should be in [0, 1].'
        self.cells_shape = tuple(cells_shape)
        n_cells = 1
        for d in self.cells_shape:
            n_cells *= d
        assert n_cells % 128 == 0, "cells must flatten to a multiple of 128 lanes"
        self.L = 128
        self.R = n_cells // self.L
        self.TR = _pick_row_tile(self.R)

        f32 = jnp.float32
        flat = (self.R, self.L)
        # State buffers (reset_state()).
        self.v_cell = jnp.full(flat, float(v_rest), f32)
        self.trace = jnp.zeros(flat, f32)
        self.refrac_counts = jnp.zeros(flat, f32)

        # Scalar parameters are baked into the kernel (the torch module builds
        # them as uniform per-cell splats of these scalars in __init__).
        self._step = jax.jit(functools.partial(
            _lif_step,
            cells_shape=self.cells_shape, R=self.R, L=self.L, TR=self.TR,
            thresh=float(thresh), v_rest=float(v_rest),
            alpha_v=float(alpha_v), alpha_t=float(alpha_t),
            tau_v=float(tau_v), tau_t=float(tau_t),
            dt=float(dt), duration_refrac=float(duration_refrac)))

    def forward(self, x):
        """x: (B, C, H, W, S) spikes (bool/int8/float). Returns (spikes_bool, trace)."""
        assert x.shape[:-1] == self.cells_shape
        spikes, trace_out, v_n, trace_n, refrac_n = self._step(
            x, self.v_cell, self.trace, self.refrac_counts)
        # Commit updated state (torch module mutates its buffers in forward).
        self.v_cell = v_n
        self.trace = trace_n
        self.refrac_counts = refrac_n
        return spikes, trace_out


def _reference_step(x, v, trace, refrac, *, thresh, v_rest, alpha_v, alpha_t,
                    tau_v, tau_t, dt, duration_refrac):
    """Pure-JAX reference of one forward step (same formulas)."""
    i_in = jnp.sum(x, axis=-1, dtype=jnp.float32)
    non_refrac = (refrac <= 0.0).astype(jnp.float32)
    v = v + non_refrac * (alpha_v * i_in - (dt * tau_v) * (v - v_rest))
    spikes = v >= thresh
    s = spikes.astype(jnp.float32)
    trace = trace - (dt * tau_t) * trace + alpha_t * s
    if duration_refrac > 0:
        refrac = jnp.maximum(refrac - dt, 0.0) + duration_refrac * s
    v = jnp.where(spikes, v_rest, v)
    return spikes, trace, v, refrac


if __name__ == "__main__":
    # cells_shape = (batch, C, H, W); S incoming connections per neuron.
    B, C, H, W, S = 2, 4, 16, 16, 8           # 2*4*16*16 = 2048 cells = 16 * 128
    key = jax.random.PRNGKey(0)
    # Presynaptic spikes kept in a 1-byte dtype end-to-end; the fold upcasts.
    x = jax.random.uniform(key, (B, C, H, W, S)) < 0.5

    params = dict(thresh=0.5, v_rest=0.0, alpha_v=0.3, alpha_t=1.0,
                  dt=1.0, duration_refrac=3.0, tau_v=0.2, tau_t=0.3)
    neuron = LIFNeuronPallas(cells_shape=(B, C, H, W), **params)

    # Reference state (reset values, in cells_shape layout).
    v_r = jnp.full((B, C, H, W), params['v_rest'], jnp.float32)
    t_r = jnp.zeros((B, C, H, W), jnp.float32)
    r_r = jnp.zeros((B, C, H, W), jnp.float32)

    spikes = trace = None
    # Two steps: exercises refractory dynamics and in-place state aliasing.
    for _ in range(2):
        spikes, trace = neuron.forward(x)
        jax.block_until_ready((spikes, trace))
        s_ref, t_r, v_r, r_r = _reference_step(x, v_r, t_r, r_r, **params)

        assert spikes.shape == (B, C, H, W) and spikes.dtype == jnp.bool_
        assert trace.shape == (B, C, H, W) and trace.dtype == jnp.float32
        np.testing.assert_array_equal(np.asarray(spikes), np.asarray(s_ref))
        np.testing.assert_allclose(np.asarray(trace), np.asarray(t_r),
                                   rtol=1e-6, atol=1e-6)

    jax.block_until_ready((spikes, trace))
    print("KERNEL_OK")
</pallas_src>

<mosaic_0001>
module attributes {stable_mosaic.version = 11 : i64} {
  func.func @_lif_kernel(%arg0: i32, %arg1: memref<16x128xf32, #tpu.memory_space<vmem>>, %arg2: memref<16x128xf32, #tpu.memory_space<vmem>>, %arg3: memref<16x128xf32, #tpu.memory_space<vmem>>, %arg4: memref<16x128xf32, #tpu.memory_space<vmem>>, %arg5: memref<16x128xi8, #tpu.memory_space<vmem>>, %arg6: memref<16x128xf32, #tpu.memory_space<vmem>>, %arg7: memref<16x128xf32, #tpu.memory_space<vmem>>, %arg8: memref<16x128xf32, #tpu.memory_space<vmem>>) attributes {dimension_semantics = [#tpu.dimension_semantics<parallel>], iteration_bounds = array<i64: 1>, scalar_prefetch = 0 : i64, scratch_operands = 0 : i64, tpu.core_type = #tpu.core_type<tc>, window_params = [{transform_indices = @transform_0, window_bounds = array<i64: 16, 128>}, {transform_indices = @transform_1, window_bounds = array<i64: 16, 128>}, {transform_indices = @transform_2, window_bounds = array<i64: 16, 128>}, {transform_indices = @transform_3, window_bounds = array<i64: 16, 128>}, {transform_indices = @transform_4, window_bounds = array<i64: 16, 128>}, {transform_indices = @transform_5, window_bounds = array<i64: 16, 128>}, {transform_indices = @transform_6, window_bounds = array<i64: 16, 128>}, {transform_indices = @transform_7, window_bounds = array<i64: 16, 128>}]} {
    %c0 = arith.constant 0 : index
    %c0_0 = arith.constant 0 : index
    %0 = vector.load %arg1[%c0, %c0_0] : memref<16x128xf32, #tpu.memory_space<vmem>>, vector<16x128xf32>
    %c0_1 = arith.constant 0 : index
    %c0_2 = arith.constant 0 : index
    %1 = vector.load %arg2[%c0_1, %c0_2] : memref<16x128xf32, #tpu.memory_space<vmem>>, vector<16x128xf32>
    %c0_3 = arith.constant 0 : index
    %c0_4 = arith.constant 0 : index
    %2 = vector.load %arg3[%c0_3, %c0_4] : memref<16x128xf32, #tpu.memory_space<vmem>>, vector<16x128xf32>
    %c0_5 = arith.constant 0 : index
    %c0_6 = arith.constant 0 : index
    %3 = vector.load %arg4[%c0_5, %c0_6] : memref<16x128xf32, #tpu.memory_space<vmem>>, vector<16x128xf32>
    %cst = arith.constant 0.000000e+00 : f32
    %4 = vector.broadcast %cst : f32 to vector<16x128xf32>
    %5 = arith.cmpf ole, %3, %4 : vector<16x128xf32>
    %6 = arith.extui %5 : vector<16x128xi1> to vector<16x128xi32>
    %7 = arith.sitofp %6 : vector<16x128xi32> to vector<16x128xf32>
    %cst_7 = arith.constant 3.000000e-01 : f32
    %8 = vector.broadcast %cst_7 : f32 to vector<16x128xf32>
    %9 = arith.mulf %8, %0 : vector<16x128xf32>
    %cst_8 = arith.constant 0.000000e+00 : f32
    %10 = vector.broadcast %cst_8 : f32 to vector<16x128xf32>
    %11 = arith.subf %1, %10 : vector<16x128xf32>
    %cst_9 = arith.constant 2.000000e-01 : f32
    %12 = vector.broadcast %cst_9 : f32 to vector<16x128xf32>
    %13 = arith.mulf %12, %11 : vector<16x128xf32>
    %14 = arith.subf %9, %13 : vector<16x128xf32>
    %15 = arith.mulf %7, %14 : vector<16x128xf32>
    %16 = arith.addf %1, %15 : vector<16x128xf32>
    %cst_10 = arith.constant 5.000000e-01 : f32
    %17 = vector.broadcast %cst_10 : f32 to vector<16x128xf32>
    %18 = arith.cmpf oge, %16, %17 : vector<16x128xf32>
    %19 = arith.extui %18 : vector<16x128xi1> to vector<16x128xi32>
    %20 = arith.sitofp %19 : vector<16x128xi32> to vector<16x128xf32>
    %cst_11 = arith.constant 3.000000e-01 : f32
    %21 = vector.broadcast %cst_11 : f32 to vector<16x128xf32>
    %22 = arith.mulf %21, %2 : vector<16x128xf32>
    %23 = arith.subf %2, %22 : vector<16x128xf32>
    %cst_12 = arith.constant 1.000000e+00 : f32
    %24 = vector.broadcast %cst_12 : f32 to vector<16x128xf32>
    %25 = arith.mulf %24, %20 : vector<16x128xf32>
    %26 = arith.addf %23, %25 : vector<16x128xf32>
    %cst_13 = arith.constant 1.000000e+00 : f32
    %27 = vector.broadcast %cst_13 : f32 to vector<16x128xf32>
    %28 = arith.subf %3, %27 : vector<16x128xf32>
    %cst_14 = arith.constant 0.000000e+00 : f32
    %29 = vector.broadcast %cst_14 : f32 to vector<16x128xf32>
    %30 = arith.maximumf %28, %29 : vector<16x128xf32>
    %cst_15 = arith.constant 3.000000e+00 : f32
    %31 = vector.broadcast %cst_15 : f32 to vector<16x128xf32>
    %32 = arith.mulf %31, %20 : vector<16x128xf32>
    %33 = arith.addf %30, %32 : vector<16x128xf32>
    %cst_16 = arith.constant 0.000000e+00 : f32
    %34 = vector.broadcast %cst_16 : f32 to vector<16x128xf32>
    %35 = arith.select %18, %34, %16 : vector<16x128xi1>, vector<16x128xf32>
    %36 = arith.extui %18 : vector<16x128xi1> to vector<16x128xi8>
    %c0_17 = arith.constant 0 : index
    %c0_18 = arith.constant 0 : index
    %37 = vector.load %arg5[%c0_17, %c0_18] : memref<16x128xi8, #tpu.memory_space<vmem>>, vector<16x128xi8>
    tpu.vector_store %arg5[%c0_17, %c0_18], %36 {strides = array<i32>} : memref<16x128xi8, #tpu.memory_space<vmem>>, vector<16x128xi8>,
    %c0_19 = arith.constant 0 : index
    %c0_20 = arith.constant 0 : index
    %38 = vector.load %arg6[%c0_19, %c0_20] : memref<16x128xf32, #tpu.memory_space<vmem>>, vector<16x128xf32>
    tpu.vector_store %arg6[%c0_19, %c0_20], %26 {strides = array<i32>} : memref<16x128xf32, #tpu.memory_space<vmem>>, vector<16x128xf32>,
    %c0_21 = arith.constant 0 : index
    %c0_22 = arith.constant 0 : index
    %39 = vector.load %arg7[%c0_21, %c0_22] : memref<16x128xf32, #tpu.memory_space<vmem>>, vector<16x128xf32>
    tpu.vector_store %arg7[%c0_21, %c0_22], %35 {strides = array<i32>} : memref<16x128xf32, #tpu.memory_space<vmem>>, vector<16x128xf32>,
    %c0_23 = arith.constant 0 : index
    %c0_24 = arith.constant 0 : index
    %40 = vector.load %arg8[%c0_23, %c0_24] : memref<16x128xf32, #tpu.memory_space<vmem>>, vector<16x128xf32>
    tpu.vector_store %arg8[%c0_23, %c0_24], %33 {strides = array<i32>} : memref<16x128xf32, #tpu.memory_space<vmem>>, vector<16x128xf32>,
    return
  }
  func.func @transform_0(%arg0: i32) -> (i32, i32) {
    %c0_i32 = arith.constant 0 : i32
    %c0_i32_0 = arith.constant 0 : i32
    return %arg0, %c0_i32 : i32, i32
  }
  func.func @transform_1(%arg0: i32) -> (i32, i32) {
    %c0_i32 = arith.constant 0 : i32
    %c0_i32_0 = arith.constant 0 : i32
    return %arg0, %c0_i32 : i32, i32
  }
  func.func @transform_2(%arg0: i32) -> (i32, i32) {
    %c0_i32 = arith.constant 0 : i32
    %c0_i32_0 = arith.constant 0 : i32
    return %arg0, %c0_i32 : i32, i32
  }
  func.func @transform_3(%arg0: i32) -> (i32, i32) {
    %c0_i32 = arith.constant 0 : i32
    %c0_i32_0 = arith.constant 0 : i32
    return %arg0, %c0_i32 : i32, i32
  }
  func.func @transform_4(%arg0: i32) -> (i32, i32) {
    %c0_i32 = arith.constant 0 : i32
    %c0_i32_0 = arith.constant 0 : i32
    return %arg0, %c0_i32 : i32, i32
  }
  func.func @transform_5(%arg0: i32) -> (i32, i32) {
    %c0_i32 = arith.constant 0 : i32
    %c0_i32_0 = arith.constant 0 : i32
    return %arg0, %c0_i32 : i32, i32
  }
  func.func @transform_6(%arg0: i32) -> (i32, i32) {
    %c0_i32 = arith.constant 0 : i32
    %c0_i32_0 = arith.constant 0 : i32
    return %arg0, %c0_i32 : i32, i32
  }
  func.func @transform_7(%arg0: i32) -> (i32, i32) {
    %c0_i32 = arith.constant 0 : i32
    %c0_i32_0 = arith.constant 0 : i32
    return %arg0, %c0_i32 : i32, i32
  }
}

</mosaic_0001>

<llo_original>
// kernel: _lif_step.1
$region0: #{_lif_step.1}
  #allocation0 [shape = 'u32[]', space=smem, size = 0x4, offset = 0x4, fixed_abs, tag = 'smem constant byte address 0x4 - core index']
  #allocation1 [shape = 'u32[144,128]{1,0:T(1,128)}', space=vmem, size = 0x12000, scoped, tag = 'internal scratch']
  %s0 = inlined_call_operand.vmem [shape: f32[16,128], index: 0, kind: input, shape index: {}]
  %s1 = inlined_call_operand.vmem [shape: f32[16,128], index: 1, kind: input, shape index: {}, may-alias: {1,6}]
  %s2 = inlined_call_operand.vmem [shape: f32[16,128], index: 2, kind: input, shape index: {}, may-alias: {2,5}]
  %s3 = inlined_call_operand.vmem [shape: f32[16,128], index: 3, kind: input, shape index: {}, may-alias: {3,7}]
  %s4 = inlined_call_operand.vmem [shape: s8[16,128], index: 4, kind: output, shape index: {0}]
  %s5 = inlined_call_operand.vmem [shape: f32[16,128], index: 5, kind: output, shape index: {1}, may-alias: {2,5}]
  %s6 = inlined_call_operand.vmem [shape: f32[16,128], index: 6, kind: output, shape index: {2}, may-alias: {1,6}]
  %s7 = inlined_call_operand.vmem [shape: f32[16,128], index: 7, kind: output, shape index: {3}, may-alias: {3,7}]
  %8 = xla_tuple %s4, %s5, %s6, %s7
  %s9 = sld [smem:[#allocation0]]
  $region50: #{_lif_step.1} parent=0
    _
  %s11 = ssub.s32 1, %s9
  %s12 = scalar_select 0, %s11, %s9
  // Predicated region
  $region2: #{_lif_step.1} parent=0 // pred_check
    _
  $region3: #{_lif_step.1} parent=0 // pred_check_branch
    %14 = sbr.rel (0) target = $region5
  $region4: #{_lif_step.1} parent=0 // pred_region
    _
  $region5: #{_lif_step.1} parent=0 // pred_fallthru
    _
  // Predicated region
  $region6: #{_lif_step.1} parent=0 // pred_check
    _
  $region7: #{_lif_step.1} parent=0 // pred_check_branch
    %16 = sbr.rel (0) target = $region9
  $region8: #{_lif_step.1} parent=0 // pred_region
    _
  $region9: #{_lif_step.1} parent=0 // pred_fallthru
    _
  // Predicated region
  $region10: #{_lif_step.1} parent=0 // pred_check
    _
  $region11: #{_lif_step.1} parent=0 // pred_check_branch
    %18 = sbr.rel (0) target = $region13
  $region12: #{_lif_step.1} parent=0 // pred_region
    _
  $region13: #{_lif_step.1} parent=0 // pred_fallthru
    _
  // Predicated region
  $region14: #{_lif_step.1} parent=0 // pred_check
    _
  $region15: #{_lif_step.1} parent=0 // pred_check_branch
    %20 = sbr.rel (0) target = $region17
  $region16: #{_lif_step.1} parent=0 // pred_region
    _
  $region17: #{_lif_step.1} parent=0 // pred_fallthru
    _
  %v23 = vld [vmem:[%s0] sm:$0xff]
  %v24 = vld [vmem:[%s0 + $0x8] sm:$0xff]
  %v25 = vld [vmem:[%s1] sm:$0xff]
  %v26 = vld [vmem:[%s1 + $0x8] sm:$0xff]
  %v27 = vld [vmem:[%s2] sm:$0xff]
  %v28 = vld [vmem:[%s2 + $0x8] sm:$0xff]
  %v29 = vld [vmem:[%s3] sm:$0xff]
  %v30 = vld [vmem:[%s3 + $0x8] sm:$0xff]
  %vm31 = vcmp.le.f32.partialorder %v29, 0.0
  %vm32 = vcmp.le.f32.partialorder %v30, 0.0
  %v33 = vsel %vm31, 1, 0
  %v34 = vsel %vm32, 1, 0
  %v35 = vcvt.s32.f32 %v33
  %v36 = vcvt.s32.f32 %v34
  %v37 = vmul.f32 %v23, 0.3
  %v38 = vmul.f32 %v24, 0.3
  %v39 = vmul.f32 %v25, 0.2
  %v40 = vmul.f32 %v26, 0.2
  %v41 = vsub.f32 %v37, %v39
  %v42 = vsub.f32 %v38, %v40
  %v43 = vmul.f32 %v35, %v41
  %v44 = vmul.f32 %v36, %v42
  %v45 = vadd.f32 %v25, %v43
  %v46 = vadd.f32 %v26, %v44
  %vm47 = vcmp.ge.f32.partialorder %v45, 0.5
  %vm48 = vcmp.ge.f32.partialorder %v46, 0.5
  %v49 = vsel %vm47, 1, 0
  %v50 = vsel %vm48, 1, 0
  %v51 = vcvt.s32.f32 %v49
  %v52 = vcvt.s32.f32 %v50
  %v53 = vmul.f32 %v27, 0.3
  %v54 = vmul.f32 %v28, 0.3
  %v55 = vsub.f32 %v27, %v53
  %v56 = vsub.f32 %v28, %v54
  %v57 = vadd.f32 %v55, %v51
  %v58 = vadd.f32 %v56, %v52
  %v59 = vsub.f32 %v29, 1.0
  %v60 = vsub.f32 %v30, 1.0
  %v61 = vmax.f32 %v59, 0.0
  %v62 = vmax.f32 %v60, 0.0
  %v63 = vmul.f32 %v51, 3.0
  %v64 = vmul.f32 %v52, 3.0
  %v65 = vadd.f32 %v61, %v63
  %v66 = vadd.f32 %v62, %v64
  %v67 = vsel %vm47, 0.0, %v45
  %v68 = vsel %vm48, 0.0, %v46
  %vm69 = vmpackc.low %vm48, %vm47
  %vm70 = vmpackc.even %vm69, %vm69
  %v71 = vsel %vm70, 16843009, 0
  %v72 = vunpack.c.0.s8 %v71
  %v73 = vunpack.c.1.s8 %v71
  %v74 = vpack.c.b16 %v72, %v72
  %v75 = vpack.c.b8 %v74, %v74
  %v76 = vpack.c.b16 %v73, %v73
  %v77 = vpack.c.b8 %v76, %v76
  %78 = vst [vmem:[%s4] sm:$0x3] %v75
  %79 = vst [vmem:[%s4 + $0x2] sm:$0x3] %v77
  %80 = vst [vmem:[%s5] sm:$0xff] %v57
  %81 = vst [vmem:[%s5 + $0x8] sm:$0xff] %v58
  %82 = vst [vmem:[%s6] sm:$0xff] %v67
  %83 = vst [vmem:[%s6 + $0x8] sm:$0xff] %v68
  %84 = vst [vmem:[%s7] sm:$0xff] %v65
  %85 = vst [vmem:[%s7 + $0x8] sm:$0xff] %v66
  // Predicated region
  $region18: #{_lif_step.1} parent=0 // pred_check
    _
  $region19: #{_lif_step.1} parent=0 // pred_check_branch
    %87 = sbr.rel (0) target = $region21
  $region20: #{_lif_step.1} parent=0 // pred_region
    _
  $region21: #{_lif_step.1} parent=0 // pred_fallthru
    _
  // Predicated region
  $region22: #{_lif_step.1} parent=0 // pred_check
    _
  $region23: #{_lif_step.1} parent=0 // pred_check_branch
    %89 = sbr.rel (0) target = $region25
  $region24: #{_lif_step.1} parent=0 // pred_region
    _
  $region25: #{_lif_step.1} parent=0 // pred_fallthru
    _
  // Predicated region
  $region26: #{_lif_step.1} parent=0 // pred_check
    _
  $region27: #{_lif_step.1} parent=0 // pred_check_branch
    %91 = sbr.rel (0) target = $region29
  $region28: #{_lif_step.1} parent=0 // pred_region
    _
  $region29: #{_lif_step.1} parent=0 // pred_fallthru
    _
  // Predicated region
  $region30: #{_lif_step.1} parent=0 // pred_check
    _
  $region31: #{_lif_step.1} parent=0 // pred_check_branch
    %93 = sbr.rel (0) target = $region33
  $region32: #{_lif_step.1} parent=0 // pred_region
    _
  $region33: #{_lif_step.1} parent=0 // pred_fallthru
    _
  // Predicated region
  $region34: #{_lif_step.1} parent=0 // pred_check
    _
  $region35: #{_lif_step.1} parent=0 // pred_check_branch
    %95 = sbr.rel (0) target = $region37
  $region36: #{_lif_step.1} parent=0 // pred_region
    _
  $region37: #{_lif_step.1} parent=0 // pred_fallthru
    _
  // Predicated region
  $region38: #{_lif_step.1} parent=0 // pred_check
    _
  $region39: #{_lif_step.1} parent=0 // pred_check_branch
    %97 = sbr.rel (0) target = $region41
  $region40: #{_lif_step.1} parent=0 // pred_region
    _
  $region41: #{_lif_step.1} parent=0 // pred_fallthru
    _
  // Predicated region
  $region42: #{_lif_step.1} parent=0 // pred_check
    _
  $region43: #{_lif_step.1} parent=0 // pred_check_branch
    %99 = sbr.rel (0) target = $region45
  $region44: #{_lif_step.1} parent=0 // pred_region
    _
  $region45: #{_lif_step.1} parent=0 // pred_fallthru
    _
  // Predicated region
  $region46: #{_lif_step.1} parent=0 // pred_check
    _
  $region47: #{_lif_step.1} parent=0 // pred_check_branch
    %101 = sbr.rel (0) target = $region49
  $region48: #{_lif_step.1} parent=0 // pred_region
    _
  $region49: #{_lif_step.1} parent=0 // pred_fallthru
    _

</llo_original>
